<compile_context>
chip_gen: v5e
topology: v5e:2x2
jax: 0.10.0
libtpu: 0.0.40
codegen_flags: <defaults>
</compile_context>

<pallas_src>
import functools

import jax
import jax.numpy as jnp
from jax import lax
from jax.experimental import pallas as pl
from jax.experimental.pallas import tpu as pltpu

EPS = 1e-5
MXU_DTYPE = jnp.bfloat16   # conv-matmul operand dtype (accumulation is f32);
                           # set to jnp.float32 for bit-tight f32 matching.


def _basic_block_kernel(xpad_ref, w1_ref, g1_ref, b1_ref,
                        w2_ref, g2_ref, b2_ref,
                        out_ref, mid_ref, *, c):
    """Whole BasicBlock forward, fully VMEM-resident, lane-dense layout.

    xpad_ref : (N, H+2, W*C) f32   H-zero-padded input rows
    w*_ref   : (3, W*C, W*C) bf16  block-tridiagonal conv weights (one per ky)
    g*/b*_ref: (1, W*C)      f32   BN gamma/beta tiled per channel over W
    out_ref  : (N, H, W*C)   f32   output rows
    mid_ref  : (N, H+2, W*C) bf16  scratch: H-padded conv1 intermediate
    c        : channel count (static)
    """
    n, hp, wc = xpad_ref.shape
    h = hp - 2
    m = n * h
    inv_cnt = 1.0 / float(m * (wc // c))        # 1 / (N*H*W)

    def conv3x3(src_ref, w_ref):
        # 3x3 "same" conv as 3 lane-dense (M, W*C) x (W*C, W*C) MXU matmuls.
        # kx taps and W-direction zero padding live inside the banded weight;
        # ky taps come from the padded-row slices.  Accumulator starts from
        # the first tap's dot (no zeros+add).
        acc = None
        for ky in range(3):
            slab = src_ref[:, ky:ky + h, :].reshape(m, wc).astype(w_ref.dtype)
            d = jnp.dot(slab, w_ref[ky], preferred_element_type=jnp.float32)
            acc = d if acc is None else acc + d
        return acc                                # (M, W*C) f32

    def batchnorm(y, g_ref, b_ref):
        # Training-mode BN in one pass: sum & sum-of-squares, biased variance,
        # folded scale/shift.  Channel c lives in lanes {x*C + c}; a log-tree
        # of circular lane rolls (XLU) both reduces over the W lane-groups and
        # leaves the per-channel totals replicated across them (no reshape or
        # re-broadcast needed).
        s1 = jnp.sum(y, axis=0, keepdims=True)            # (1, W*C)
        s2 = jnp.sum(y * y, axis=0, keepdims=True)        # (1, W*C)
        sh = c
        while sh < wc:                                    # requires W = 2^k
            s1 = s1 + pltpu.roll(s1, shift=sh, axis=1)
            s2 = s2 + pltpu.roll(s2, shift=sh, axis=1)
            sh *= 2
        mean = s1 * inv_cnt
        var = s2 * inv_cnt - mean * mean                  # biased variance
        scale = g_ref[...] * lax.rsqrt(var + EPS)         # EUP rsqrt
        shift = b_ref[...] - mean * scale
        return y * scale + shift

    # conv1 -> bn1 -> relu
    y1 = jnp.maximum(batchnorm(conv3x3(xpad_ref, w1_ref), g1_ref, b1_ref), 0.0)

    # Re-pad the intermediate along H into bf16 scratch: zero only the 1-row
    # borders, then a single interior store (no full-buffer zeroing).
    zrow = jnp.zeros((n, 1, wc), mid_ref.dtype)
    mid_ref[:, 0:1, :] = zrow
    mid_ref[:, h + 1:h + 2, :] = zrow
    mid_ref[:, 1:1 + h, :] = y1.reshape(n, h, wc).astype(mid_ref.dtype)

    # conv2 -> bn2 -> residual add -> relu
    y2 = batchnorm(conv3x3(mid_ref, w2_ref), g2_ref, b2_ref)
    identity = xpad_ref[:, 1:1 + h, :]                    # residual, exact f32
    out_ref[...] = jnp.maximum(y2.reshape(n, h, wc) + identity, 0.0)


@jax.jit
def basic_block_forward(x_nchw, w1, g1, b1, w2, g2, b2):
    """x_nchw: (N, C, H, W) f32.  w*: (Cout, Cin, 3, 3) PyTorch OIHW, g*/b*: (C,)."""
    n, c, h, w = x_nchw.shape
    wc = w * c
    assert w & (w - 1) == 0, "W must be a power of two (log-tree BN reduction)"
    # Best performance when W*C is a multiple of 128 (fully lane-dense rows).

    # Layout glue (outside the hot kernel): NCHW -> NHWC -> (N, H, W*C) rows,
    # pad H only; the W-direction zero padding is folded into the weights.
    x_rows = jnp.transpose(x_nchw, (0, 2, 3, 1)).reshape(n, h, wc)
    xpad = jnp.pad(x_rows, ((0, 0), (1, 1), (0, 0)))

    def banded(wconv):
        # OIHW (Cout, Cin, 3, 3) -> (3, W*C, W*C) block-tridiagonal weights:
        #   Wk[(x+dx)*C + ci, x*C + co] = w[co, ci, ky, dx+1],  dx = kx-1.
        # Out-of-range blocks are simply absent => "same" zero padding in W.
        wt = jnp.transpose(wconv, (2, 3, 1, 0))           # (3, 3, Cin, Cout)
        rows = []
        for ky in range(3):
            k = jnp.zeros((wc, wc), jnp.float32)
            for kx in range(3):
                k = k + jnp.kron(jnp.eye(w, k=-(kx - 1), dtype=jnp.float32),
                                 wt[ky, kx])
            rows.append(k)
        return jnp.stack(rows, 0).astype(MXU_DTYPE)

    w1b, w2b = banded(w1), banded(w2)
    tile_c = lambda v: jnp.tile(v.astype(jnp.float32), w).reshape(1, wc)
    g1t, b1t, g2t, b2t = tile_c(g1), tile_c(b1), tile_c(g2), tile_c(b2)

    full = lambda shape: pl.BlockSpec(shape, lambda i: (0,) * len(shape))

    out_rows = pl.pallas_call(
        functools.partial(_basic_block_kernel, c=c),
        out_shape=jax.ShapeDtypeStruct((n, h, wc), jnp.float32),
        grid=(1,),
        in_specs=[
            full((n, h + 2, wc)),            # xpad
            full((3, wc, wc)),               # conv1 banded weights
            full((1, wc)), full((1, wc)),    # bn1 gamma / beta (channel-tiled)
            full((3, wc, wc)),               # conv2 banded weights
            full((1, wc)), full((1, wc)),    # bn2 gamma / beta
        ],
        out_specs=full((n, h, wc)),
        scratch_shapes=[pltpu.VMEM((n, h + 2, wc), MXU_DTYPE)],
        compiler_params=pltpu.CompilerParams(
            dimension_semantics=("arbitrary",)),
    )(xpad, w1b, g1t, b1t, w2b, g2t, b2t)

    return jnp.transpose(out_rows.reshape(n, h, w, c), (0, 3, 1, 2))  # NCHW


def _reference_forward(x, w1, g1, b1, w2, g2, b2):
    """Pure-JAX f32 reference (NCHW, mirrors the PyTorch module)."""
    def conv(x, w):
        return lax.conv_general_dilated(
            x, w, window_strides=(1, 1), padding="SAME",
            dimension_numbers=("NCHW", "OIHW", "NCHW"))

    def bn(x, g, b):
        mean = x.mean(axis=(0, 2, 3), keepdims=True)
        var = ((x - mean) ** 2).mean(axis=(0, 2, 3), keepdims=True)
        return (g.reshape(1, -1, 1, 1) * (x - mean) / jnp.sqrt(var + EPS)
                + b.reshape(1, -1, 1, 1))

    out = jax.nn.relu(bn(conv(x, w1), g1, b1))
    out = bn(conv(out, w2), g2, b2)
    return jax.nn.relu(out + x)


if __name__ == "__main__":
    # Small shapes consistent with the module; W*C = 16*8 = 128 (lane-dense).
    N, C, H, W = 2, 8, 16, 16

    key = jax.random.PRNGKey(0)
    kx, kw1, kw2, kg1, kb1, kg2, kb2 = jax.random.split(key, 7)

    x = jax.random.normal(kx, (N, C, H, W), jnp.float32)

    fan_in = C * 3 * 3
    w1 = jax.random.normal(kw1, (C, C, 3, 3), jnp.float32) * (2.0 / fan_in) ** 0.5
    w2 = jax.random.normal(kw2, (C, C, 3, 3), jnp.float32) * (2.0 / fan_in) ** 0.5
    g1 = 1.0 + 0.1 * jax.random.normal(kg1, (C,), jnp.float32)
    b1 = 0.1 * jax.random.normal(kb1, (C,), jnp.float32)
    g2 = 1.0 + 0.1 * jax.random.normal(kg2, (C,), jnp.float32)
    b2 = 0.1 * jax.random.normal(kb2, (C,), jnp.float32)

    out = basic_block_forward(x, w1, g1, b1, w2, g2, b2)
    out = jax.block_until_ready(out)

    ref = _reference_forward(x, w1, g1, b1, w2, g2, b2)
    assert out.shape == (N, C, H, W)
    # Mixed precision: conv operands are bf16 (f32 accumulation) per the
    # v6e/v7x feedback; two chained 3x3 convs + BN give worst-case abs error
    # of a few 1e-2 vs. the pure-f32 reference.
    max_err = float(jnp.max(jnp.abs(out - ref)))
    assert jnp.allclose(out, ref, atol=5e-2, rtol=5e-2), max_err

    print("KERNEL_OK")
</pallas_src>

<mosaic_0001>
module attributes {stable_mosaic.version = 11 : i64} {
  func.func @_basic_block_kernel(%arg0: i32, %arg1: memref<2x18x128xf32, #tpu.memory_space<vmem>>, %arg2: memref<3x128x128xbf16, #tpu.memory_space<vmem>>, %arg3: memref<1x128xf32, #tpu.memory_space<vmem>>, %arg4: memref<1x128xf32, #tpu.memory_space<vmem>>, %arg5: memref<3x128x128xbf16, #tpu.memory_space<vmem>>, %arg6: memref<1x128xf32, #tpu.memory_space<vmem>>, %arg7: memref<1x128xf32, #tpu.memory_space<vmem>>, %arg8: memref<2x16x128xf32, #tpu.memory_space<vmem>>, %arg9: memref<2x18x128xbf16, #tpu.memory_space<vmem>>) attributes {dimension_semantics = [#tpu.dimension_semantics<arbitrary>], iteration_bounds = array<i64: 1>, scalar_prefetch = 0 : i64, scratch_operands = 1 : i64, tpu.core_type = #tpu.core_type<tc>, window_params = [{pipeline_mode = #tpu.pipeline_mode<synchronous>, transform_indices = @transform_0, window_bounds = array<i64: 2, 18, 128>}, {pipeline_mode = #tpu.pipeline_mode<synchronous>, transform_indices = @transform_1, window_bounds = array<i64: 3, 128, 128>}, {pipeline_mode = #tpu.pipeline_mode<synchronous>, transform_indices = @transform_2, window_bounds = array<i64: 1, 128>}, {pipeline_mode = #tpu.pipeline_mode<synchronous>, transform_indices = @transform_3, window_bounds = array<i64: 1, 128>}, {pipeline_mode = #tpu.pipeline_mode<synchronous>, transform_indices = @transform_4, window_bounds = array<i64: 3, 128, 128>}, {pipeline_mode = #tpu.pipeline_mode<synchronous>, transform_indices = @transform_5, window_bounds = array<i64: 1, 128>}, {pipeline_mode = #tpu.pipeline_mode<synchronous>, transform_indices = @transform_6, window_bounds = array<i64: 1, 128>}, {pipeline_mode = #tpu.pipeline_mode<synchronous>, transform_indices = @transform_7, window_bounds = array<i64: 2, 16, 128>}]} {
    %c0 = arith.constant 0 : index
    %c0_0 = arith.constant 0 : index
    %c0_1 = arith.constant 0 : index
    %0 = vector.load %arg1[%c0, %c0_0, %c0_1] : memref<2x18x128xf32, #tpu.memory_space<vmem>>, vector<2x16x128xf32>
    %1 = vector.shape_cast %0 : vector<2x16x128xf32> to vector<32x128xf32>
    %2 = arith.truncf %1 : vector<32x128xf32> to vector<32x128xbf16>
    %c0_2 = arith.constant 0 : index
    %c0_3 = arith.constant 0 : index
    %c0_4 = arith.constant 0 : index
    %3 = vector.load %arg2[%c0_2, %c0_3, %c0_4] : memref<3x128x128xbf16, #tpu.memory_space<vmem>>, vector<1x128x128xbf16>
    %4 = vector.shape_cast %3 : vector<1x128x128xbf16> to vector<128x128xbf16>
    %cst = arith.constant dense<0.000000e+00> : vector<32x128xf32>
    %5 = tpu.matmul %2, %4, %cst {dimension_numbers = #tpu.dot_dimension_numbers<[1], [0], [0], [1], [0, 0, 1, 1], [], []>} : vector<32x128xbf16>, vector<128x128xbf16>, vector<32x128xf32> -> vector<32x128xf32>
    %c0_5 = arith.constant 0 : index
    %c1 = arith.constant 1 : index
    %c0_6 = arith.constant 0 : index
    %6 = vector.load %arg1[%c0_5, %c1, %c0_6] : memref<2x18x128xf32, #tpu.memory_space<vmem>>, vector<2x16x128xf32>
    %7 = vector.shape_cast %6 : vector<2x16x128xf32> to vector<32x128xf32>
    %8 = arith.truncf %7 : vector<32x128xf32> to vector<32x128xbf16>
    %c1_7 = arith.constant 1 : index
    %c0_8 = arith.constant 0 : index
    %c0_9 = arith.constant 0 : index
    %9 = vector.load %arg2[%c1_7, %c0_8, %c0_9] : memref<3x128x128xbf16, #tpu.memory_space<vmem>>, vector<1x128x128xbf16>
    %10 = vector.shape_cast %9 : vector<1x128x128xbf16> to vector<128x128xbf16>
    %cst_10 = arith.constant dense<0.000000e+00> : vector<32x128xf32>
    %11 = tpu.matmul %8, %10, %cst_10 {dimension_numbers = #tpu.dot_dimension_numbers<[1], [0], [0], [1], [0, 0, 1, 1], [], []>} : vector<32x128xbf16>, vector<128x128xbf16>, vector<32x128xf32> -> vector<32x128xf32>
    %12 = arith.addf %5, %11 : vector<32x128xf32>
    %c0_11 = arith.constant 0 : index
    %c2 = arith.constant 2 : index
    %c0_12 = arith.constant 0 : index
    %13 = vector.load %arg1[%c0_11, %c2, %c0_12] : memref<2x18x128xf32, #tpu.memory_space<vmem>>, vector<2x16x128xf32>
    %14 = vector.shape_cast %13 : vector<2x16x128xf32> to vector<32x128xf32>
    %15 = arith.truncf %14 : vector<32x128xf32> to vector<32x128xbf16>
    %c2_13 = arith.constant 2 : index
    %c0_14 = arith.constant 0 : index
    %c0_15 = arith.constant 0 : index
    %16 = vector.load %arg2[%c2_13, %c0_14, %c0_15] : memref<3x128x128xbf16, #tpu.memory_space<vmem>>, vector<1x128x128xbf16>
    %17 = vector.shape_cast %16 : vector<1x128x128xbf16> to vector<128x128xbf16>
    %cst_16 = arith.constant dense<0.000000e+00> : vector<32x128xf32>
    %18 = tpu.matmul %15, %17, %cst_16 {dimension_numbers = #tpu.dot_dimension_numbers<[1], [0], [0], [1], [0, 0, 1, 1], [], []>} : vector<32x128xbf16>, vector<128x128xbf16>, vector<32x128xf32> -> vector<32x128xf32>
    %19 = arith.addf %12, %18 : vector<32x128xf32>
    %cst_17 = arith.constant dense<0.000000e+00> : vector<128xf32>
    %20 = vector.multi_reduction <add>, %19, %cst_17 [0] : vector<32x128xf32> to vector<128xf32>
    %21 = vector.shape_cast %20 : vector<128xf32> to vector<1x128xf32>
    %22 = arith.mulf %19, %19 : vector<32x128xf32>
    %cst_18 = arith.constant dense<0.000000e+00> : vector<128xf32>
    %23 = vector.multi_reduction <add>, %22, %cst_18 [0] : vector<32x128xf32> to vector<128xf32>
    %24 = vector.shape_cast %23 : vector<128xf32> to vector<1x128xf32>
    %c8_i32 = arith.constant 8 : i32
    %25 = tpu.dynamic_rotate %21 by %c8_i32 dim 1 : vector<1x128xf32>, i32 -> vector<1x128xf32>
    %26 = arith.addf %21, %25 : vector<1x128xf32>
    %c8_i32_19 = arith.constant 8 : i32
    %27 = tpu.dynamic_rotate %24 by %c8_i32_19 dim 1 : vector<1x128xf32>, i32 -> vector<1x128xf32>
    %28 = arith.addf %24, %27 : vector<1x128xf32>
    %c16_i32 = arith.constant 16 : i32
    %29 = tpu.dynamic_rotate %26 by %c16_i32 dim 1 : vector<1x128xf32>, i32 -> vector<1x128xf32>
    %30 = arith.addf %26, %29 : vector<1x128xf32>
    %c16_i32_20 = arith.constant 16 : i32
    %31 = tpu.dynamic_rotate %28 by %c16_i32_20 dim 1 : vector<1x128xf32>, i32 -> vector<1x128xf32>
    %32 = arith.addf %28, %31 : vector<1x128xf32>
    %c32_i32 = arith.constant 32 : i32
    %33 = tpu.dynamic_rotate %30 by %c32_i32 dim 1 : vector<1x128xf32>, i32 -> vector<1x128xf32>
    %34 = arith.addf %30, %33 : vector<1x128xf32>
    %c32_i32_21 = arith.constant 32 : i32
    %35 = tpu.dynamic_rotate %32 by %c32_i32_21 dim 1 : vector<1x128xf32>, i32 -> vector<1x128xf32>
    %36 = arith.addf %32, %35 : vector<1x128xf32>
    %c64_i32 = arith.constant 64 : i32
    %37 = tpu.dynamic_rotate %34 by %c64_i32 dim 1 : vector<1x128xf32>, i32 -> vector<1x128xf32>
    %38 = arith.addf %34, %37 : vector<1x128xf32>
    %c64_i32_22 = arith.constant 64 : i32
    %39 = tpu.dynamic_rotate %36 by %c64_i32_22 dim 1 : vector<1x128xf32>, i32 -> vector<1x128xf32>
    %40 = arith.addf %36, %39 : vector<1x128xf32>
    %cst_23 = arith.constant 0.001953125 : f32
    %41 = vector.broadcast %cst_23 : f32 to vector<1x128xf32>
    %42 = arith.mulf %38, %41 : vector<1x128xf32>
    %cst_24 = arith.constant 0.001953125 : f32
    %43 = vector.broadcast %cst_24 : f32 to vector<1x128xf32>
    %44 = arith.mulf %40, %43 : vector<1x128xf32>
    %45 = arith.mulf %42, %42 : vector<1x128xf32>
    %46 = arith.subf %44, %45 : vector<1x128xf32>
    %c0_25 = arith.constant 0 : index
    %c0_26 = arith.constant 0 : index
    %47 = vector.load %arg3[%c0_25, %c0_26] : memref<1x128xf32, #tpu.memory_space<vmem>>, vector<1x128xf32>
    %cst_27 = arith.constant 9.99999974E-6 : f32
    %48 = vector.broadcast %cst_27 : f32 to vector<1x128xf32>
    %49 = arith.addf %46, %48 : vector<1x128xf32>
    %50 = math.rsqrt %49 : vector<1x128xf32>
    %51 = arith.mulf %47, %50 : vector<1x128xf32>
    %c0_28 = arith.constant 0 : index
    %c0_29 = arith.constant 0 : index
    %52 = vector.load %arg4[%c0_28, %c0_29] : memref<1x128xf32, #tpu.memory_space<vmem>>, vector<1x128xf32>
    %53 = arith.mulf %42, %51 : vector<1x128xf32>
    %54 = arith.subf %52, %53 : vector<1x128xf32>
    %55 = vector.broadcast %51 : vector<1x128xf32> to vector<32x128xf32>
    %56 = arith.mulf %19, %55 : vector<32x128xf32>
    %57 = vector.broadcast %54 : vector<1x128xf32> to vector<32x128xf32>
    %58 = arith.addf %56, %57 : vector<32x128xf32>
    %cst_30 = arith.constant 0.000000e+00 : f32
    %59 = vector.broadcast %cst_30 : f32 to vector<32x128xf32>
    %60 = arith.maximumf %58, %59 : vector<32x128xf32>
    %cst_31 = arith.constant 0.000000e+00 : bf16
    %61 = vector.broadcast %cst_31 : bf16 to vector<2x1x128xbf16>
    %c0_32 = arith.constant 0 : index
    %c0_33 = arith.constant 0 : index
    %c0_34 = arith.constant 0 : index
    %62 = vector.load %arg9[%c0_32, %c0_33, %c0_34] : memref<2x18x128xbf16, #tpu.memory_space<vmem>>, vector<2x1x128xbf16>
    tpu.vector_store %arg9[%c0_32, %c0_33, %c0_34], %61 {strides = array<i32>} : memref<2x18x128xbf16, #tpu.memory_space<vmem>>, vector<2x1x128xbf16>,
    %c0_35 = arith.constant 0 : index
    %c17 = arith.constant 17 : index
    %c0_36 = arith.constant 0 : index
    %63 = vector.load %arg9[%c0_35, %c17, %c0_36] : memref<2x18x128xbf16, #tpu.memory_space<vmem>>, vector<2x1x128xbf16>
    tpu.vector_store %arg9[%c0_35, %c17, %c0_36], %61 {strides = array<i32>} : memref<2x18x128xbf16, #tpu.memory_space<vmem>>, vector<2x1x128xbf16>,
    %64 = vector.shape_cast %60 : vector<32x128xf32> to vector<2x16x128xf32>
    %65 = arith.truncf %64 : vector<2x16x128xf32> to vector<2x16x128xbf16>
    %c0_37 = arith.constant 0 : index
    %c1_38 = arith.constant 1 : index
    %c0_39 = arith.constant 0 : index
    %66 = vector.load %arg9[%c0_37, %c1_38, %c0_39] : memref<2x18x128xbf16, #tpu.memory_space<vmem>>, vector<2x16x128xbf16>
    tpu.vector_store %arg9[%c0_37, %c1_38, %c0_39], %65 {strides = array<i32>} : memref<2x18x128xbf16, #tpu.memory_space<vmem>>, vector<2x16x128xbf16>,
    %c0_40 = arith.constant 0 : index
    %c0_41 = arith.constant 0 : index
    %c0_42 = arith.constant 0 : index
    %67 = vector.load %arg9[%c0_40, %c0_41, %c0_42] : memref<2x18x128xbf16, #tpu.memory_space<vmem>>, vector<2x16x128xbf16>
    %68 = vector.shape_cast %67 : vector<2x16x128xbf16> to vector<32x128xbf16>
    %c0_43 = arith.constant 0 : index
    %c0_44 = arith.constant 0 : index
    %c0_45 = arith.constant 0 : index
    %69 = vector.load %arg5[%c0_43, %c0_44, %c0_45] : memref<3x128x128xbf16, #tpu.memory_space<vmem>>, vector<1x128x128xbf16>
    %70 = vector.shape_cast %69 : vector<1x128x128xbf16> to vector<128x128xbf16>
    %cst_46 = arith.constant dense<0.000000e+00> : vector<32x128xf32>
    %71 = tpu.matmul %68, %70, %cst_46 {dimension_numbers = #tpu.dot_dimension_numbers<[1], [0], [0], [1], [0, 0, 1, 1], [], []>} : vector<32x128xbf16>, vector<128x128xbf16>, vector<32x128xf32> -> vector<32x128xf32>
    %c0_47 = arith.constant 0 : index
    %c1_48 = arith.constant 1 : index
    %c0_49 = arith.constant 0 : index
    %72 = vector.load %arg9[%c0_47, %c1_48, %c0_49] : memref<2x18x128xbf16, #tpu.memory_space<vmem>>, vector<2x16x128xbf16>
    %73 = vector.shape_cast %72 : vector<2x16x128xbf16> to vector<32x128xbf16>
    %c1_50 = arith.constant 1 : index
    %c0_51 = arith.constant 0 : index
    %c0_52 = arith.constant 0 : index
    %74 = vector.load %arg5[%c1_50, %c0_51, %c0_52] : memref<3x128x128xbf16, #tpu.memory_space<vmem>>, vector<1x128x128xbf16>
    %75 = vector.shape_cast %74 : vector<1x128x128xbf16> to vector<128x128xbf16>
    %cst_53 = arith.constant dense<0.000000e+00> : vector<32x128xf32>
    %76 = tpu.matmul %73, %75, %cst_53 {dimension_numbers = #tpu.dot_dimension_numbers<[1], [0], [0], [1], [0, 0, 1, 1], [], []>} : vector<32x128xbf16>, vector<128x128xbf16>, vector<32x128xf32> -> vector<32x128xf32>
    %77 = arith.addf %71, %76 : vector<32x128xf32>
    %c0_54 = arith.constant 0 : index
    %c2_55 = arith.constant 2 : index
    %c0_56 = arith.constant 0 : index
    %78 = vector.load %arg9[%c0_54, %c2_55, %c0_56] : memref<2x18x128xbf16, #tpu.memory_space<vmem>>, vector<2x16x128xbf16>
    %79 = vector.shape_cast %78 : vector<2x16x128xbf16> to vector<32x128xbf16>
    %c2_57 = arith.constant 2 : index
    %c0_58 = arith.constant 0 : index
    %c0_59 = arith.constant 0 : index
    %80 = vector.load %arg5[%c2_57, %c0_58, %c0_59] : memref<3x128x128xbf16, #tpu.memory_space<vmem>>, vector<1x128x128xbf16>
    %81 = vector.shape_cast %80 : vector<1x128x128xbf16> to vector<128x128xbf16>
    %cst_60 = arith.constant dense<0.000000e+00> : vector<32x128xf32>
    %82 = tpu.matmul %79, %81, %cst_60 {dimension_numbers = #tpu.dot_dimension_numbers<[1], [0], [0], [1], [0, 0, 1, 1], [], []>} : vector<32x128xbf16>, vector<128x128xbf16>, vector<32x128xf32> -> vector<32x128xf32>
    %83 = arith.addf %77, %82 : vector<32x128xf32>
    %cst_61 = arith.constant dense<0.000000e+00> : vector<128xf32>
    %84 = vector.multi_reduction <add>, %83, %cst_61 [0] : vector<32x128xf32> to vector<128xf32>
    %85 = vector.shape_cast %84 : vector<128xf32> to vector<1x128xf32>
    %86 = arith.mulf %83, %83 : vector<32x128xf32>
    %cst_62 = arith.constant dense<0.000000e+00> : vector<128xf32>
    %87 = vector.multi_reduction <add>, %86, %cst_62 [0] : vector<32x128xf32> to vector<128xf32>
    %88 = vector.shape_cast %87 : vector<128xf32> to vector<1x128xf32>
    %c8_i32_63 = arith.constant 8 : i32
    %89 = tpu.dynamic_rotate %85 by %c8_i32_63 dim 1 : vector<1x128xf32>, i32 -> vector<1x128xf32>
    %90 = arith.addf %85, %89 : vector<1x128xf32>
    %c8_i32_64 = arith.constant 8 : i32
    %91 = tpu.dynamic_rotate %88 by %c8_i32_64 dim 1 : vector<1x128xf32>, i32 -> vector<1x128xf32>
    %92 = arith.addf %88, %91 : vector<1x128xf32>
    %c16_i32_65 = arith.constant 16 : i32
    %93 = tpu.dynamic_rotate %90 by %c16_i32_65 dim 1 : vector<1x128xf32>, i32 -> vector<1x128xf32>
    %94 = arith.addf %90, %93 : vector<1x128xf32>
    %c16_i32_66 = arith.constant 16 : i32
    %95 = tpu.dynamic_rotate %92 by %c16_i32_66 dim 1 : vector<1x128xf32>, i32 -> vector<1x128xf32>
    %96 = arith.addf %92, %95 : vector<1x128xf32>
    %c32_i32_67 = arith.constant 32 : i32
    %97 = tpu.dynamic_rotate %94 by %c32_i32_67 dim 1 : vector<1x128xf32>, i32 -> vector<1x128xf32>
    %98 = arith.addf %94, %97 : vector<1x128xf32>
    %c32_i32_68 = arith.constant 32 : i32
    %99 = tpu.dynamic_rotate %96 by %c32_i32_68 dim 1 : vector<1x128xf32>, i32 -> vector<1x128xf32>
    %100 = arith.addf %96, %99 : vector<1x128xf32>
    %c64_i32_69 = arith.constant 64 : i32
    %101 = tpu.dynamic_rotate %98 by %c64_i32_69 dim 1 : vector<1x128xf32>, i32 -> vector<1x128xf32>
    %102 = arith.addf %98, %101 : vector<1x128xf32>
    %c64_i32_70 = arith.constant 64 : i32
    %103 = tpu.dynamic_rotate %100 by %c64_i32_70 dim 1 : vector<1x128xf32>, i32 -> vector<1x128xf32>
    %104 = arith.addf %100, %103 : vector<1x128xf32>
    %cst_71 = arith.constant 0.001953125 : f32
    %105 = vector.broadcast %cst_71 : f32 to vector<1x128xf32>
    %106 = arith.mulf %102, %105 : vector<1x128xf32>
    %cst_72 = arith.constant 0.001953125 : f32
    %107 = vector.broadcast %cst_72 : f32 to vector<1x128xf32>
    %108 = arith.mulf %104, %107 : vector<1x128xf32>
    %109 = arith.mulf %106, %106 : vector<1x128xf32>
    %110 = arith.subf %108, %109 : vector<1x128xf32>
    %c0_73 = arith.constant 0 : index
    %c0_74 = arith.constant 0 : index
    %111 = vector.load %arg6[%c0_73, %c0_74] : memref<1x128xf32, #tpu.memory_space<vmem>>, vector<1x128xf32>
    %cst_75 = arith.constant 9.99999974E-6 : f32
    %112 = vector.broadcast %cst_75 : f32 to vector<1x128xf32>
    %113 = arith.addf %110, %112 : vector<1x128xf32>
    %114 = math.rsqrt %113 : vector<1x128xf32>
    %115 = arith.mulf %111, %114 : vector<1x128xf32>
    %c0_76 = arith.constant 0 : index
    %c0_77 = arith.constant 0 : index
    %116 = vector.load %arg7[%c0_76, %c0_77] : memref<1x128xf32, #tpu.memory_space<vmem>>, vector<1x128xf32>
    %117 = arith.mulf %106, %115 : vector<1x128xf32>
    %118 = arith.subf %116, %117 : vector<1x128xf32>
    %119 = vector.broadcast %115 : vector<1x128xf32> to vector<32x128xf32>
    %120 = arith.mulf %83, %119 : vector<32x128xf32>
    %121 = vector.broadcast %118 : vector<1x128xf32> to vector<32x128xf32>
    %122 = arith.addf %120, %121 : vector<32x128xf32>
    %c0_78 = arith.constant 0 : index
    %c1_79 = arith.constant 1 : index
    %c0_80 = arith.constant 0 : index
    %123 = vector.load %arg1[%c0_78, %c1_79, %c0_80] : memref<2x18x128xf32, #tpu.memory_space<vmem>>, vector<2x16x128xf32>
    %124 = vector.shape_cast %122 : vector<32x128xf32> to vector<2x16x128xf32>
    %125 = arith.addf %124, %123 : vector<2x16x128xf32>
    %cst_81 = arith.constant 0.000000e+00 : f32
    %126 = vector.broadcast %cst_81 : f32 to vector<2x16x128xf32>
    %127 = arith.maximumf %125, %126 : vector<2x16x128xf32>
    %c0_82 = arith.constant 0 : index
    %c0_83 = arith.constant 0 : index
    %c0_84 = arith.constant 0 : index
    %128 = vector.load %arg8[%c0_82, %c0_83, %c0_84] : memref<2x16x128xf32, #tpu.memory_space<vmem>>, vector<2x16x128xf32>
    tpu.vector_store %arg8[%c0_82, %c0_83, %c0_84], %127 {strides = array<i32>} : memref<2x16x128xf32, #tpu.memory_space<vmem>>, vector<2x16x128xf32>,
    return
  }
  func.func @transform_0(%arg0: i32) -> (i32, i32, i32) {
    %c0_i32 = arith.constant 0 : i32
    %c0_i32_0 = arith.constant 0 : i32
    %c0_i32_1 = arith.constant 0 : i32
    %c0_i32_2 = arith.constant 0 : i32
    return %c0_i32, %c0_i32_0, %c0_i32_1 : i32, i32, i32
  }
  func.func @transform_1(%arg0: i32) -> (i32, i32, i32) {
    %c0_i32 = arith.constant 0 : i32
    %c0_i32_0 = arith.constant 0 : i32
    %c0_i32_1 = arith.constant 0 : i32
    %c0_i32_2 = arith.constant 0 : i32
    return %c0_i32, %c0_i32_0, %c0_i32_1 : i32, i32, i32
  }
  func.func @transform_2(%arg0: i32) -> (i32, i32) {
    %c0_i32 = arith.constant 0 : i32
    %c0_i32_0 = arith.constant 0 : i32
    %c0_i32_1 = arith.constant 0 : i32
    return %c0_i32, %c0_i32_0 : i32, i32
  }
  func.func @transform_3(%arg0: i32) -> (i32, i32) {
    %c0_i32 = arith.constant 0 : i32
    %c0_i32_0 = arith.constant 0 : i32
    %c0_i32_1 = arith.constant 0 : i32
    return %c0_i32, %c0_i32_0 : i32, i32
  }
  func.func @transform_4(%arg0: i32) -> (i32, i32, i32) {
    %c0_i32 = arith.constant 0 : i32
    %c0_i32_0 = arith.constant 0 : i32
    %c0_i32_1 = arith.constant 0 : i32
    %c0_i32_2 = arith.constant 0 : i32
    return %c0_i32, %c0_i32_0, %c0_i32_1 : i32, i32, i32
  }
  func.func @transform_5(%arg0: i32) -> (i32, i32) {
    %c0_i32 = arith.constant 0 : i32
    %c0_i32_0 = arith.constant 0 : i32
    %c0_i32_1 = arith.constant 0 : i32
    return %c0_i32, %c0_i32_0 : i32, i32
  }
  func.func @transform_6(%arg0: i32) -> (i32, i32) {
    %c0_i32 = arith.constant 0 : i32
    %c0_i32_0 = arith.constant 0 : i32
    %c0_i32_1 = arith.constant 0 : i32
    return %c0_i32, %c0_i32_0 : i32, i32
  }
  func.func @transform_7(%arg0: i32) -> (i32, i32, i32) {
    %c0_i32 = arith.constant 0 : i32
    %c0_i32_0 = arith.constant 0 : i32
    %c0_i32_1 = arith.constant 0 : i32
    %c0_i32_2 = arith.constant 0 : i32
    return %c0_i32, %c0_i32_0, %c0_i32_1 : i32, i32, i32
  }
}

</mosaic_0001>

<llo_original>
// kernel: tile.23
$region0: #{tile.23}
  #allocation0 [shape = 's32[1]{0}', space=sflag, size = 0x4, scoped, tag = 'scoped memory for tile.23']
  %s0 = inlined_call_operand.vmem [shape: f32[8], index: 0, kind: input, shape index: {}]
  %s1 = inlined_call_operand.vmem [shape: f32[16,8], index: 1, kind: output, shape index: {}]
  // Predicated region
  $region2: #{tile.23} parent=0 // pred_check
    _
  $region3: #{tile.23} parent=0 // pred_check_branch
    %3 = sbr.rel (0) target = $region5
  $region4: #{tile.23} parent=0 // pred_region
    _
  $region5: #{tile.23} parent=0 // pred_fallthru
    _
  %v4 = vld [vmem:[%s0] ss:$0 sm:$0xff]
  %5 = vst [vmem:[%s1] sm:$0xff] %v4
  %s6 = scalar_lea.vmem %s1, 8
  %7 = vst [vmem:[%s6] sm:$0xff] %v4

// kernel: tile.24
$region0: #{tile.24}
  %s0 = inlined_call_operand.vmem [shape: f32[16,8], index: 0, kind: input, shape index: {}]
  %s1 = inlined_call_operand.vmem [shape: f32[1,128], index: 1, kind: output, shape index: {}]
  $region1: #{tile.24} parent=0
    #allocation0 [shape = 'u8[4096]{0}', space=vmem, size = 0x1000, scoped, tag = 'scoped mem for output reshape']
    %v2 = vld [vmem:[%s0] sm:$0x1]
    %vm3 = vcmask 64512
    %4 = vst.msk [vmem:[#allocation0] sm:$0x1] %vm3, %v2
    %s5 = scalar_lea.vmem %s0, 15
    %v6 = vld [vmem:[%s5] sm:$0x1]
    %7 = vrot.lane.b32.xlu0 %v6, 120
    %v8 = vpop.permute.xlu0 %7
    %vm9 = vcmask 1048512
    %10 = vst.msk [vmem:[#allocation0] sm:$0x1] %vm9, %v8
    %s11 = scalar_lea.vmem %s0, 14
    %v12 = vld [vmem:[%s11] sm:$0x1]
    %13 = vrot.lane.b32.xlu0 %v12, 112
    %v14 = vpop.permute.xlu0 %13
    %vm15 = vcmask 982912
    %16 = vst.msk [vmem:[#allocation0] sm:$0x1] %vm15, %v14
    %s17 = scalar_lea.vmem %s0, 13
    %v18 = vld [vmem:[%s17] sm:$0x1]
    %19 = vrot.lane.b32.xlu0 %v18, 104
    %v20 = vpop.permute.xlu0 %19
    %vm21 = vcmask 917312
    %22 = vst.msk [vmem:[#allocation0] sm:$0x1] %vm21, %v20
    %s23 = scalar_lea.vmem %s0, 12
    %v24 = vld [vmem:[%s23] sm:$0x1]
    %25 = vrot.lane.b32.xlu0 %v24, 96
    %v26 = vpop.permute.xlu0 %25
    %vm27 = vcmask 851712
    %28 = vst.msk [vmem:[#allocation0] sm:$0x1] %vm27, %v26
    %s29 = scalar_lea.vmem %s0, 11
    %v30 = vld [vmem:[%s29] sm:$0x1]
    %31 = vrot.lane.b32.xlu0 %v30, 88
    %v32 = vpop.permute.xlu0 %31
    %vm33 = vcmask 786112
    %34 = vst.msk [vmem:[#allocation0] sm:$0x1] %vm33, %v32
    %s35 = scalar_lea.vmem %s0, 10
    %v36 = vld [vmem:[%s35] sm:$0x1]
    %37 = vrot.lane.b32.xlu0 %v36, 80
    %v38 = vpop.permute.xlu0 %37
    %vm39 = vcmask 720512
    %40 = vst.msk [vmem:[#allocation0] sm:$0x1] %vm39, %v38
    %s41 = scalar_lea.vmem %s0, 9
    %v42 = vld [vmem:[%s41] sm:$0x1]
    %43 = vrot.lane.b32.xlu0 %v42, 72
    %v44 = vpop.permute.xlu0 %43
    %vm45 = vcmask 654912
    %46 = vst.msk [vmem:[#allocation0] sm:$0x1] %vm45, %v44
    %s47 = scalar_lea.vmem %s0, 8
    %v48 = vld [vmem:[%s47] sm:$0x1]
    %49 = vrot.lane.b32.xlu0 %v48, 64
    %v50 = vpop.permute.xlu0 %49
    %vm51 = vcmask 589312
    %52 = vst.msk [vmem:[#allocation0] sm:$0x1] %vm51, %v50
    %s53 = scalar_lea.vmem %s0, 7
    %v54 = vld [vmem:[%s53] sm:$0x1]
    %55 = vrot.lane.b32.xlu0 %v54, 56
    %v56 = vpop.permute.xlu0 %55
    %vm57 = vcmask 523712
    %58 = vst.msk [vmem:[#allocation0] sm:$0x1] %vm57, %v56
    %s59 = scalar_lea.vmem %s0, 6
    %v60 = vld [vmem:[%s59] sm:$0x1]
    %61 = vrot.lane.b32.xlu0 %v60, 48
    %v62 = vpop.permute.xlu0 %61
    %vm63 = vcmask 458112
    %64 = vst.msk [vmem:[#allocation0] sm:$0x1] %vm63, %v62
    %s65 = scalar_lea.vmem %s0, 5
    %v66 = vld [vmem:[%s65] sm:$0x1]
    %67 = vrot.lane.b32.xlu0 %v66, 40
    %v68 = vpop.permute.xlu0 %67
    %vm69 = vcmask 392512
    %70 = vst.msk [vmem:[#allocation0] sm:$0x1] %vm69, %v68
    %s71 = scalar_lea.vmem %s0, 4
    %v72 = vld [vmem:[%s71] sm:$0x1]
    %73 = vrot.lane.b32.xlu0 %v72, 32
    %v74 = vpop.permute.xlu0 %73
    %vm75 = vcmask 326912
    %76 = vst.msk [vmem:[#allocation0] sm:$0x1] %vm75, %v74
    %s77 = scalar_lea.vmem %s0, 3
    %v78 = vld [vmem:[%s77] sm:$0x1]
    %79 = vrot.lane.b32.xlu0 %v78, 24
    %v80 = vpop.permute.xlu0 %79
    %vm81 = vcmask 261312
    %82 = vst.msk [vmem:[#allocation0] sm:$0x1] %vm81, %v80
    %s83 = scalar_lea.vmem %s0, 2
    %v84 = vld [vmem:[%s83] sm:$0x1]
    %85 = vrot.lane.b32.xlu0 %v84, 16
    %v86 = vpop.permute.xlu0 %85
    %vm87 = vcmask 195712
    %88 = vst.msk [vmem:[#allocation0] sm:$0x1] %vm87, %v86
    %s89 = scalar_lea.vmem %s0, 1
    %v90 = vld [vmem:[%s89] sm:$0x1]
    %91 = vrot.lane.b32.xlu0 %v90, 8
    %v92 = vpop.permute.xlu0 %91
    %vm93 = vcmask 130112
    %94 = vst.msk [vmem:[#allocation0] sm:$0x1] %vm93, %v92
    %s96 = ssub.s32 2, 1
    %v97 = vld [vmem:[#allocation0] sm:%s96]
    %s99 = ssub.s32 2, 1
    %100 = vst [vmem:[%s1] sm:%s99] %v97

// kernel: basic_block_forward.1
$region0: #{basic_block_forward.1}
  #allocation0 [shape = 'u32[]', space=smem, size = 0x4, offset = 0x4, fixed_abs, tag = 'smem constant byte address 0x4 - core index']
  #allocation1 [shape = 'u32[72,128]{1,0:T(1,128)}', space=vmem, size = 0x9000, scoped, tag = 'internal scratch']
  #allocation2 [shape = 'bf16[2,18,128]{2,1,0:T(8,128)(2,1)}', space=vmem, size = 0x3000, scoped, tag = 'scratch operand']
  %s0 = inlined_call_operand.vmem [shape: f32[2,18,128], index: 0, kind: input, shape index: {}]
  %s1 = inlined_call_operand.vmem [shape: bf16[3,128,128], index: 1, kind: input, shape index: {}]
  %s2 = inlined_call_operand.vmem [shape: f32[1,128], index: 2, kind: input, shape index: {}]
  %s3 = inlined_call_operand.vmem [shape: f32[1,128], index: 3, kind: input, shape index: {}]
  %s4 = inlined_call_operand.vmem [shape: bf16[3,128,128], index: 4, kind: input, shape index: {}]
  %s5 = inlined_call_operand.vmem [shape: f32[1,128], index: 5, kind: input, shape index: {}]
  %s6 = inlined_call_operand.vmem [shape: f32[1,128], index: 6, kind: input, shape index: {}]
  %s7 = inlined_call_operand.vmem [shape: f32[2,16,128], index: 7, kind: output, shape index: {}]
  %s8 = sld [smem:[#allocation0]]
  $region38: #{basic_block_forward.1} parent=0
    _
  %s10 = ssub.s32 1, %s8
  %s11 = scalar_select 0, %s10, %s8
  // Predicated region
  $region2: #{basic_block_forward.1} parent=0 // pred_check
    _
  $region3: #{basic_block_forward.1} parent=0 // pred_check_branch
    %13 = sbr.rel (0) target = $region5
  $region4: #{basic_block_forward.1} parent=0 // pred_region
    _
  $region5: #{basic_block_forward.1} parent=0 // pred_fallthru
    _
  // Predicated region
  $region6: #{basic_block_forward.1} parent=0 // pred_check
    _
  $region7: #{basic_block_forward.1} parent=0 // pred_check_branch
    %15 = sbr.rel (0) target = $region9
  $region8: #{basic_block_forward.1} parent=0 // pred_region
    _
  $region9: #{basic_block_forward.1} parent=0 // pred_fallthru
    _
  // Predicated region
  $region10: #{basic_block_forward.1} parent=0 // pred_check
    _
  $region11: #{basic_block_forward.1} parent=0 // pred_check_branch
    %17 = sbr.rel (0) target = $region13
  $region12: #{basic_block_forward.1} parent=0 // pred_region
    _
  $region13: #{basic_block_forward.1} parent=0 // pred_fallthru
    _
  // Predicated region
  $region14: #{basic_block_forward.1} parent=0 // pred_check
    _
  $region15: #{basic_block_forward.1} parent=0 // pred_check_branch
    %19 = sbr.rel (0) target = $region17
  $region16: #{basic_block_forward.1} parent=0 // pred_region
    _
  $region17: #{basic_block_forward.1} parent=0 // pred_fallthru
    _
  // Predicated region
  $region18: #{basic_block_forward.1} parent=0 // pred_check
    _
  $region19: #{basic_block_forward.1} parent=0 // pred_check_branch
    %21 = sbr.rel (0) target = $region21
  $region20: #{basic_block_forward.1} parent=0 // pred_region
    _
  $region21: #{basic_block_forward.1} parent=0 // pred_fallthru
    _
  // Predicated region
  $region22: #{basic_block_forward.1} parent=0 // pred_check
    _
  $region23: #{basic_block_forward.1} parent=0 // pred_check_branch
    %23 = sbr.rel (0) target = $region25
  $region24: #{basic_block_forward.1} parent=0 // pred_region
    _
  $region25: #{basic_block_forward.1} parent=0 // pred_fallthru
    _
  // Predicated region
  $region26: #{basic_block_forward.1} parent=0 // pred_check
    _
  $region27: #{basic_block_forward.1} parent=0 // pred_check_branch
    %25 = sbr.rel (0) target = $region29
  $region28: #{basic_block_forward.1} parent=0 // pred_region
    _
  $region29: #{basic_block_forward.1} parent=0 // pred_fallthru
    _
  %v27 = vld [vmem:[%s0] sm:$0xff]
  %v28 = vld [vmem:[%s0 + $0x8] sm:$0xff]
  %v29 = vld [vmem:[%s0 + $0x18] sm:$0xff]
  %v30 = vld [vmem:[%s0 + $0x20] sm:$0xff]
  %v31 = vpack.c.bf16 %v28, %v27
  %v32 = vpack.c.bf16 %v30, %v29
  %v33 = vld [vmem:[%s1] sm:$0xf]
  %v34 = vld [vmem:[%s1 + $0x4] sm:$0xf]
  %v35 = vld [vmem:[%s1 + $0x8] sm:$0xf]
  %v36 = vld [vmem:[%s1 + $0xc] sm:$0xf]
  %v37 = vld [vmem:[%s1 + $0x10] sm:$0xf]
  %v38 = vld [vmem:[%s1 + $0x14] sm:$0xf]
  %v39 = vld [vmem:[%s1 + $0x18] sm:$0xf]
  %v40 = vld [vmem:[%s1 + $0x1c] sm:$0xf]
  %v41 = vld [vmem:[%s1 + $0x20] sm:$0xf]
  %v42 = vld [vmem:[%s1 + $0x24] sm:$0xf]
  %v43 = vld [vmem:[%s1 + $0x28] sm:$0xf]
  %v44 = vld [vmem:[%s1 + $0x2c] sm:$0xf]
  %v45 = vld [vmem:[%s1 + $0x30] sm:$0xf]
  %v46 = vld [vmem:[%s1 + $0x34] sm:$0xf]
  %v47 = vld [vmem:[%s1 + $0x38] sm:$0xf]
  %v48 = vld [vmem:[%s1 + $0x3c] sm:$0xf]
  %v49 = vld [vmem:[%s0 + $0x1] sm:$0xff]
  %v50 = vld [vmem:[%s0 + $0x9] sm:$0xff]
  %v51 = vld [vmem:[%s0 + $0x19] sm:$0xff]
  %v52 = vld [vmem:[%s0 + $0x21] sm:$0xff]
  %v53 = vpack.c.bf16 %v50, %v49
  %v54 = vpack.c.bf16 %v52, %v51
  %s55 = scalar_lea.vmem %s1, 64
  %v56 = vld [vmem:[%s55] sm:$0xf]
  %v57 = vld [vmem:[%s55 + $0x4] sm:$0xf]
  %v58 = vld [vmem:[%s55 + $0x8] sm:$0xf]
  %v59 = vld [vmem:[%s55 + $0xc] sm:$0xf]
  %v60 = vld [vmem:[%s55 + $0x10] sm:$0xf]
  %v61 = vld [vmem:[%s55 + $0x14] sm:$0xf]
  %v62 = vld [vmem:[%s55 + $0x18] sm:$0xf]
  %v63 = vld [vmem:[%s55 + $0x1c] sm:$0xf]
  %v64 = vld [vmem:[%s55 + $0x20] sm:$0xf]
  %v65 = vld [vmem:[%s55 + $0x24] sm:$0xf]
  %v66 = vld [vmem:[%s55 + $0x28] sm:$0xf]
  %v67 = vld [vmem:[%s55 + $0x2c] sm:$0xf]
  %v68 = vld [vmem:[%s55 + $0x30] sm:$0xf]
  %v69 = vld [vmem:[%s55 + $0x34] sm:$0xf]
  %v70 = vld [vmem:[%s55 + $0x38] sm:$0xf]
  %v71 = vld [vmem:[%s55 + $0x3c] sm:$0xf]
  %v88 = vunpack.c.l.b16 %v56
  %v89 = vunpack.c.l.b16 %v57
  %v90 = vunpack.c.l.b16 %v58
  %v91 = vunpack.c.l.b16 %v59
  %v92 = vunpack.c.l.b16 %v60
  %v93 = vunpack.c.l.b16 %v61
  %v94 = vunpack.c.l.b16 %v62
  %v95 = vunpack.c.l.b16 %v63
  %v96 = vunpack.c.l.b16 %v64
  %v97 = vunpack.c.l.b16 %v65
  %v98 = vunpack.c.l.b16 %v66
  %v99 = vunpack.c.l.b16 %v67
  %v100 = vunpack.c.l.b16 %v68
  %v101 = vunpack.c.l.b16 %v69
  %v102 = vunpack.c.l.b16 %v70
  %v103 = vunpack.c.l.b16 %v71
  %v104 = vpack.c.b16 %v89, %v88
  %v105 = vpack.c.b16 %v91, %v90
  %v106 = vpack.c.b16 %v93, %v92
  %v107 = vpack.c.b16 %v95, %v94
  %v108 = vpack.c.b16 %v97, %v96
  %v109 = vpack.c.b16 %v99, %v98
  %v110 = vpack.c.b16 %v101, %v100
  %v111 = vpack.c.b16 %v103, %v102
  %120 = vmatpush.bf16.msra.mxu0 %v111
  %121 = vmatpush.bf16.msra.mxu0 %v110
  %122 = vmatpush.bf16.msra.mxu0 %v109
  %123 = vmatpush.bf16.msra.mxu0 %v108
  %124 = vmatpush.bf16.msra.mxu0 %v107
  %125 = vmatpush.bf16.msra.mxu0 %v106
  %126 = vmatpush.bf16.msra.mxu0 %v105
  %127 = vmatpush.bf16.msra.mxu0 %v104
  %128 = vmatmul.bf16.gmra.mxu0 %v53
  %v129 = vpop.f32.mrf.mxu0
  %v130 = vadd.f32 0.0, %v129
  %v131 = vpop.f32.mrf.mxu0
  %v132 = vadd.f32 0.0, %v131
  %133 = vmatmul.bf16.gmra.mxu0 %v54
  %v134 = vpop.f32.mrf.mxu0
  %v135 = vadd.f32 0.0, %v134
  %v136 = vpop.f32.mrf.mxu0
  %v137 = vadd.f32 0.0, %v136
  %138 = vdwg.mxu0
  %v155 = vunpack.c.l.b16 %v33
  %v156 = vunpack.c.l.b16 %v34
  %v157 = vunpack.c.l.b16 %v35
  %v158 = vunpack.c.l.b16 %v36
  %v159 = vunpack.c.l.b16 %v37
  %v160 = vunpack.c.l.b16 %v38
  %v161 = vunpack.c.l.b16 %v39
  %v162 = vunpack.c.l.b16 %v40
  %v163 = vunpack.c.l.b16 %v41
  %v164 = vunpack.c.l.b16 %v42
  %v165 = vunpack.c.l.b16 %v43
  %v166 = vunpack.c.l.b16 %v44
  %v167 = vunpack.c.l.b16 %v45
  %v168 = vunpack.c.l.b16 %v46
  %v169 = vunpack.c.l.b16 %v47
  %v170 = vunpack.c.l.b16 %v48
  %v171 = vpack.c.b16 %v156, %v155
  %v172 = vpack.c.b16 %v158, %v157
  %v173 = vpack.c.b16 %v160, %v159
  %v174 = vpack.c.b16 %v162, %v161
  %v175 = vpack.c.b16 %v164, %v163
  %v176 = vpack.c.b16 %v166, %v165
  %v177 = vpack.c.b16 %v168, %v167
  %v178 = vpack.c.b16 %v170, %v169
  %187 = vmatpush.bf16.msra.mxu0 %v178
  %188 = vmatpush.bf16.msra.mxu0 %v177
  %189 = vmatpush.bf16.msra.mxu0 %v176
  %190 = vmatpush.bf16.msra.mxu0 %v175
  %191 = vmatpush.bf16.msra.mxu0 %v174
  %192 = vmatpush.bf16.msra.mxu0 %v173
  %193 = vmatpush.bf16.msra.mxu0 %v172
  %194 = vmatpush.bf16.msra.mxu0 %v171
  %195 = vmatmul.bf16.gmra.mxu0 %v31
  %v196 = vpop.f32.mrf.mxu0
  %v197 = vadd.f32 %v130, %v196
  %v198 = vpop.f32.mrf.mxu0
  %v199 = vadd.f32 %v132, %v198
  %200 = vmatmul.bf16.gmra.mxu0 %v32
  %v201 = vpop.f32.mrf.mxu0
  %v202 = vadd.f32 %v135, %v201
  %v203 = vpop.f32.mrf.mxu0
  %v204 = vadd.f32 %v137, %v203
  %205 = vdwg.mxu0
  %v206 = vld [vmem:[%s0 + $0x2] sm:$0xff]
  %v207 = vld [vmem:[%s0 + $0xa] sm:$0xff]
  %v208 = vld [vmem:[%s0 + $0x1a] sm:$0xff]
  %v209 = vld [vmem:[%s0 + $0x22] sm:$0xff]
  %v210 = vpack.c.bf16 %v207, %v206
  %v211 = vpack.c.bf16 %v209, %v208
  %s212 = scalar_lea.vmem %s1, 128
  %v213 = vld [vmem:[%s212] sm:$0xf]
  %v214 = vld [vmem:[%s212 + $0x4] sm:$0xf]
  %v215 = vld [vmem:[%s212 + $0x8] sm:$0xf]
  %v216 = vld [vmem:[%s212 + $0xc] sm:$0xf]
  %v217 = vld [vmem:[%s212 + $0x10] sm:$0xf]
  %v218 = vld [vmem:[%s212 + $0x14] sm:$0xf]
  %v219 = vld [vmem:[%s212 + $0x18] sm:$0xf]
  %v220 = vld [vmem:[%s212 + $0x1c] sm:$0xf]
  %v221 = vld [vmem:[%s212 + $0x20] sm:$0xf]
  %v222 = vld [vmem:[%s212 + $0x24] sm:$0xf]
  %v223 = vld [vmem:[%s212 + $0x28] sm:$0xf]
  %v224 = vld [vmem:[%s212 + $0x2c] sm:$0xf]
  %v225 = vld [vmem:[%s212 + $0x30] sm:$0xf]
  %v226 = vld [vmem:[%s212 + $0x34] sm:$0xf]
  %v227 = vld [vmem:[%s212 + $0x38] sm:$0xf]
  %v228 = vld [vmem:[%s212 + $0x3c] sm:$0xf]
  %v245 = vunpack.c.l.b16 %v213
  %v246 = vunpack.c.l.b16 %v214
  %v247 = vunpack.c.l.b16 %v215
  %v248 = vunpack.c.l.b16 %v216
  %v249 = vunpack.c.l.b16 %v217
  %v250 = vunpack.c.l.b16 %v218
  %v251 = vunpack.c.l.b16 %v219
  %v252 = vunpack.c.l.b16 %v220
  %v253 = vunpack.c.l.b16 %v221
  %v254 = vunpack.c.l.b16 %v222
  %v255 = vunpack.c.l.b16 %v223
  %v256 = vunpack.c.l.b16 %v224
  %v257 = vunpack.c.l.b16 %v225
  %v258 = vunpack.c.l.b16 %v226
  %v259 = vunpack.c.l.b16 %v227
  %v260 = vunpack.c.l.b16 %v228
  %v261 = vpack.c.b16 %v246, %v245
  %v262 = vpack.c.b16 %v248, %v247
  %v263 = vpack.c.b16 %v250, %v249
  %v264 = vpack.c.b16 %v252, %v251
  %v265 = vpack.c.b16 %v254, %v253
  %v266 = vpack.c.b16 %v256, %v255
  %v267 = vpack.c.b16 %v258, %v257
  %v268 = vpack.c.b16 %v260, %v259
  %277 = vmatpush.bf16.msra.mxu0 %v268
  %278 = vmatpush.bf16.msra.mxu0 %v267
  %279 = vmatpush.bf16.msra.mxu0 %v266
  %280 = vmatpush.bf16.msra.mxu0 %v265
  %281 = vmatpush.bf16.msra.mxu0 %v264
  %282 = vmatpush.bf16.msra.mxu0 %v263
  %283 = vmatpush.bf16.msra.mxu0 %v262
  %284 = vmatpush.bf16.msra.mxu0 %v261
  %285 = vmatmul.bf16.gmra.mxu0 %v210
  %v286 = vpop.f32.mrf.mxu0
  %v287 = vadd.f32 0.0, %v286
  %v288 = vpop.f32.mrf.mxu0
  %v289 = vadd.f32 0.0, %v288
  %290 = vmatmul.bf16.gmra.mxu0 %v211
  %v291 = vpop.f32.mrf.mxu0
  %v292 = vadd.f32 0.0, %v291
  %v293 = vpop.f32.mrf.mxu0
  %v294 = vadd.f32 0.0, %v293
  %295 = vdwg.mxu0
  %v296 = vadd.f32 %v197, %v287
  %v297 = vadd.f32 %v199, %v289
  %v298 = vadd.f32 %v202, %v292
  %v299 = vadd.f32 %v204, %v294
  %v300 = vadd.f32 %v296, %v297
  %v301 = vadd.f32 %v300, %v298
  %v302 = vadd.f32 %v301, %v299
  %v303 = vrot.slane %v302, 4
  %v304 = vadd.f32 %v302, %v303
  %v305 = vrot.slane %v304, 2
  %v306 = vadd.f32 %v304, %v305
  %v307 = vrot.slane %v306, 1
  %v308 = vadd.f32 %v306, %v307
  %v309 = vmul.f32 %v296, %v296
  %v310 = vmul.f32 %v297, %v297
  %v311 = vmul.f32 %v298, %v298
  %v312 = vmul.f32 %v299, %v299
  %v313 = vadd.f32 %v309, %v310
  %v314 = vadd.f32 %v313, %v311
  %v315 = vadd.f32 %v314, %v312
  %v316 = vrot.slane %v315, 4
  %v317 = vadd.f32 %v315, %v316
  %v318 = vrot.slane %v317, 2
  %v319 = vadd.f32 %v317, %v318
  %v320 = vrot.slane %v319, 1
  %v321 = vadd.f32 %v319, %v320
  %322 = vrot.lane.b32.xlu0 %v308, 8
  %v323 = vpop.permute.xlu0 %322
  %v324 = vadd.f32 %v308, %v323
  %325 = vrot.lane.b32.xlu0 %v321, 8
  %v326 = vpop.permute.xlu0 %325
  %v327 = vadd.f32 %v321, %v326
  %328 = vrot.lane.b32.xlu0 %v324, 16
  %v329 = vpop.permute.xlu0 %328
  %v330 = vadd.f32 %v324, %v329
  %331 = vrot.lane.b32.xlu0 %v327, 16
  %v332 = vpop.permute.xlu0 %331
  %v333 = vadd.f32 %v327, %v332
  %334 = vrot.lane.b32.xlu0 %v330, 32
  %v335 = vpop.permute.xlu0 %334
  %v336 = vadd.f32 %v330, %v335
  %337 = vrot.lane.b32.xlu0 %v333, 32
  %v338 = vpop.permute.xlu0 %337
  %v339 = vadd.f32 %v333, %v338
  %340 = vrot.lane.b32.xlu0 %v336, 64
  %v341 = vpop.permute.xlu0 %340
  %v342 = vadd.f32 %v336, %v341
  %343 = vrot.lane.b32.xlu0 %v339, 64
  %v344 = vpop.permute.xlu0 %343
  %v345 = vadd.f32 %v339, %v344
  %v346 = vmul.f32 %v342, 0.001953125
  %v347 = vmul.f32 %v345, 0.001953125
  %v348 = vmul.f32 %v346, %v346
  %v349 = vsub.f32 %v347, %v348
  %v350 = vld [vmem:[%s2] sm:$0x1]
  %v351 = vadd.f32 %v349, 1e-05
  %v352 = vrsqrt.pop %v351
  %v353 = vmul.f32 %v352, %v351
  %v354 = vmul.f32 %v353, %v352
  %v355 = vmul.f32 0.5, %v354
  %v356 = vsub.f32 1.5, %v355
  %v357 = vmul.f32 %v352, %v356
  %vm358 = vweird.f32 %v351
  %vm359 = vweird.f32 %v352
  %vm360 = vmor %vm358, %vm359
  %v361 = vsel %vm360, %v352, %v357
  %v362 = vmul.f32 %v350, %v361
  %v363 = vld [vmem:[%s3] sm:$0x1]
  %v364 = vmul.f32 %v346, %v362
  %v365 = vsub.f32 %v363, %v364
  %v367 = vperm.slane %v362, 0
  %v369 = vmul.f32 %v296, %v367
  %v370 = vmul.f32 %v297, %v367
  %v371 = vmul.f32 %v298, %v367
  %v372 = vmul.f32 %v299, %v367
  %v374 = vperm.slane %v365, 0
  %v376 = vadd.f32 %v369, %v374
  %v377 = vadd.f32 %v370, %v374
  %v378 = vadd.f32 %v371, %v374
  %v379 = vadd.f32 %v372, %v374
  %v380 = vmax.f32 %v376, 0.0
  %v381 = vmax.f32 %v377, 0.0
  %v382 = vmax.f32 %v378, 0.0
  %v383 = vmax.f32 %v379, 0.0
  %vm384 = vcmask 1040384
  %vm385 = vsmask.f32 256
  %vm386 = vmand %vm384, %vm385
  %v387 = vld [vmem:[#allocation2] sm:$0x1]
  %v388 = vsel %vm386, 0, %v387
  %389 = vst [vmem:[#allocation2] sm:$0x1] %v388
  %v390 = vld [vmem:[#allocation2 + $0xc] sm:$0x1]
  %v391 = vsel %vm386, 0, %v390
  %392 = vst [vmem:[#allocation2 + $0xc] sm:$0x1] %v391
  %vm393 = vsmask.f32 7938
  %vm394 = vmand %vm384, %vm393
  %v395 = vld [vmem:[#allocation2 + $0x8] sm:$0x1]
  %v396 = vsel %vm394, 0, %v395
  %397 = vst [vmem:[#allocation2 + $0x8] sm:$0x1] %v396
  %v398 = vld [vmem:[#allocation2 + $0x14] sm:$0x1]
  %v399 = vsel %vm394, 0, %v398
  %400 = vst [vmem:[#allocation2 + $0x14] sm:$0x1] %v399
  %v401 = vpack.c.bf16 %v380, %v380
  %v402 = vpack.c.bf16 %v381, %v381
  %v403 = vpack.c.bf16 %v382, %v382
  %v404 = vpack.c.bf16 %v383, %v383
  %vm405 = vsmask.f32 4368
  %vm406 = vmor %vm385, %vm405
  %v408 = vshrl.u32 %v401, 16
  %v410 = vrot.slane %v408, 7
  %v411 = vshll.u32 %v401, 16
  %v413 = vor.u32 %v410, %v411
  %v414 = vrot.slane %v410, 4
  %v416 = vshrl.u32 %v402, 16
  %v418 = vrot.slane %v416, 7
  %v419 = vshll.u32 %v402, 16
  %v421 = vor.u32 %v418, %v419
  %v422 = vsel %vm406, %v414, %v421
  %v423 = vrot.slane %v418, 4
  %v425 = vshrl.u32 %v403, 16
  %v427 = vrot.slane %v425, 7
  %v428 = vshll.u32 %v403, 16
  %v430 = vor.u32 %v427, %v428
  %v431 = vrot.slane %v427, 4
  %v433 = vshrl.u32 %v404, 16
  %v435 = vrot.slane %v433, 7
  %v436 = vshll.u32 %v404, 16
  %v438 = vor.u32 %v435, %v436
  %v439 = vsel %vm406, %v431, %v438
  %v440 = vrot.slane %v435, 4
  %vm447 = vcmask 1043456
  %vm448 = vmand %vm447, %vm393
  %v449 = vld [vmem:[#allocation2] sm:$0xf]
  %v450 = vsel %vm448, %v413, %v449
  %451 = vst [vmem:[#allocation2] sm:$0xf] %v450
  %452 = vst [vmem:[#allocation2 + $0x4] sm:$0xf] %v422
  %v453 = vld [vmem:[#allocation2 + $0x8] sm:$0x1]
  %v454 = vsel %vm386, %v423, %v453
  %455 = vst [vmem:[#allocation2 + $0x8] sm:$0x1] %v454
  %v456 = vld [vmem:[#allocation2 + $0xc] sm:$0xf]
  %v457 = vsel %vm448, %v430, %v456
  %458 = vst [vmem:[#allocation2 + $0xc] sm:$0xf] %v457
  %459 = vst [vmem:[#allocation2 + $0x10] sm:$0xf] %v439
  %v460 = vld [vmem:[#allocation2 + $0x14] sm:$0x1]
  %v461 = vsel %vm386, %v440, %v460
  %462 = vst [vmem:[#allocation2 + $0x14] sm:$0x1] %v461
  %v463 = vld [vmem:[#allocation2] sm:$0xf]
  %v464 = vld [vmem:[#allocation2 + $0x4] sm:$0xf]
  %v465 = vld [vmem:[#allocation2 + $0xc] sm:$0xf]
  %v466 = vld [vmem:[#allocation2 + $0x10] sm:$0xf]
  %v467 = vld [vmem:[%s4] sm:$0xf]
  %v468 = vld [vmem:[%s4 + $0x4] sm:$0xf]
  %v469 = vld [vmem:[%s4 + $0x8] sm:$0xf]
  %v470 = vld [vmem:[%s4 + $0xc] sm:$0xf]
  %v471 = vld [vmem:[%s4 + $0x10] sm:$0xf]
  %v472 = vld [vmem:[%s4 + $0x14] sm:$0xf]
  %v473 = vld [vmem:[%s4 + $0x18] sm:$0xf]
  %v474 = vld [vmem:[%s4 + $0x1c] sm:$0xf]
  %v475 = vld [vmem:[%s4 + $0x20] sm:$0xf]
  %v476 = vld [vmem:[%s4 + $0x24] sm:$0xf]
  %v477 = vld [vmem:[%s4 + $0x28] sm:$0xf]
  %v478 = vld [vmem:[%s4 + $0x2c] sm:$0xf]
  %v479 = vld [vmem:[%s4 + $0x30] sm:$0xf]
  %v480 = vld [vmem:[%s4 + $0x34] sm:$0xf]
  %v481 = vld [vmem:[%s4 + $0x38] sm:$0xf]
  %v482 = vld [vmem:[%s4 + $0x3c] sm:$0xf]
  %v483 = vld [vmem:[#allocation2 + $0x8] sm:$0x1]
  %v484 = vld [vmem:[#allocation2 + $0x14] sm:$0x1]
  %vm485 = vsmask.f32 3328
  %vm486 = vsmask.f32 7440
  %vm487 = vmor %vm485, %vm486
  %v489 = vshrl.u32 %v463, 16
  %v491 = vrot.slane %v489, 4
  %v492 = vshll.u32 %v463, 16
  %v494 = vrot.slane %v492, 5
  %v495 = vor.u32 %v491, %v494
  %v496 = vrot.slane %v495, 4
  %v498 = vshll.u32 %v464, 16
  %v500 = vrot.slane %v498, 5
  %v501 = vsel %vm487, %v496, %v500
  %v502 = vshrl.u32 %v464, 16
  %v504 = vrot.slane %v502, 4
  %v505 = vor.u32 %v504, %v500
  %v506 = vrot.slane %v505, 4
  %v508 = vshll.u32 %v483, 16
  %v510 = vrot.slane %v508, 5
  %v511 = vsel %vm487, %v506, %v510
  %v513 = vshrl.u32 %v465, 16
  %v515 = vrot.slane %v513, 4
  %v516 = vshll.u32 %v465, 16
  %v518 = vrot.slane %v516, 5
  %v519 = vor.u32 %v515, %v518
  %v520 = vrot.slane %v519, 4
  %v522 = vshll.u32 %v466, 16
  %v524 = vrot.slane %v522, 5
  %v525 = vsel %vm487, %v520, %v524
  %v526 = vshrl.u32 %v466, 16
  %v528 = vrot.slane %v526, 4
  %v529 = vor.u32 %v528, %v524
  %v530 = vrot.slane %v529, 4
  %v532 = vshll.u32 %v484, 16
  %v534 = vrot.slane %v532, 5
  %v535 = vsel %vm487, %v530, %v534
  %s536 = scalar_lea.vmem %s4, 64
  %v537 = vld [vmem:[%s536] sm:$0xf]
  %v538 = vld [vmem:[%s536 + $0x4] sm:$0xf]
  %v539 = vld [vmem:[%s536 + $0x8] sm:$0xf]
  %v540 = vld [vmem:[%s536 + $0xc] sm:$0xf]
  %v541 = vld [vmem:[%s536 + $0x10] sm:$0xf]
  %v542 = vld [vmem:[%s536 + $0x14] sm:$0xf]
  %v543 = vld [vmem:[%s536 + $0x18] sm:$0xf]
  %v544 = vld [vmem:[%s536 + $0x1c] sm:$0xf]
  %v545 = vld [vmem:[%s536 + $0x20] sm:$0xf]
  %v546 = vld [vmem:[%s536 + $0x24] sm:$0xf]
  %v547 = vld [vmem:[%s536 + $0x28] sm:$0xf]
  %v548 = vld [vmem:[%s536 + $0x2c] sm:$0xf]
  %v549 = vld [vmem:[%s536 + $0x30] sm:$0xf]
  %v550 = vld [vmem:[%s536 + $0x34] sm:$0xf]
  %v551 = vld [vmem:[%s536 + $0x38] sm:$0xf]
  %v552 = vld [vmem:[%s536 + $0x3c] sm:$0xf]
  %v553 = vunpack.c.l.b16 %v501
  %v554 = vunpack.c.l.b16 %v511
  %v555 = vunpack.c.l.b16 %v525
  %v556 = vunpack.c.l.b16 %v535
  %v557 = vpack.c.b16 %v554, %v553
  %v558 = vpack.c.b16 %v556, %v555
  %v577 = vunpack.c.l.b16 %v537
  %v578 = vunpack.c.l.b16 %v538
  %v579 = vunpack.c.l.b16 %v539
  %v580 = vunpack.c.l.b16 %v540
  %v581 = vunpack.c.l.b16 %v541
  %v582 = vunpack.c.l.b16 %v542
  %v583 = vunpack.c.l.b16 %v543
  %v584 = vunpack.c.l.b16 %v544
  %v585 = vunpack.c.l.b16 %v545
  %v586 = vunpack.c.l.b16 %v546
  %v587 = vunpack.c.l.b16 %v547
  %v588 = vunpack.c.l.b16 %v548
  %v589 = vunpack.c.l.b16 %v549
  %v590 = vunpack.c.l.b16 %v550
  %v591 = vunpack.c.l.b16 %v551
  %v592 = vunpack.c.l.b16 %v552
  %v593 = vpack.c.b16 %v578, %v577
  %v594 = vpack.c.b16 %v580, %v579
  %v595 = vpack.c.b16 %v582, %v581
  %v596 = vpack.c.b16 %v584, %v583
  %v597 = vpack.c.b16 %v586, %v585
  %v598 = vpack.c.b16 %v588, %v587
  %v599 = vpack.c.b16 %v590, %v589
  %v600 = vpack.c.b16 %v592, %v591
  %609 = vmatpush.bf16.msra.mxu0 %v600
  %610 = vmatpush.bf16.msra.mxu0 %v599
  %611 = vmatpush.bf16.msra.mxu0 %v598
  %612 = vmatpush.bf16.msra.mxu0 %v597
  %613 = vmatpush.bf16.msra.mxu0 %v596
  %614 = vmatpush.bf16.msra.mxu0 %v595
  %615 = vmatpush.bf16.msra.mxu0 %v594
  %616 = vmatpush.bf16.msra.mxu0 %v593
  %617 = vmatmul.bf16.gmra.mxu0 %v557
  %v618 = vpop.f32.mrf.mxu0
  %v619 = vadd.f32 0.0, %v618
  %v620 = vpop.f32.mrf.mxu0
  %v621 = vadd.f32 0.0, %v620
  %622 = vmatmul.bf16.gmra.mxu0 %v558
  %v623 = vpop.f32.mrf.mxu0
  %v624 = vadd.f32 0.0, %v623
  %v625 = vpop.f32.mrf.mxu0
  %v626 = vadd.f32 0.0, %v625
  %627 = vdwg.mxu0
  %v632 = vunpack.c.l.b16 %v463
  %v633 = vunpack.c.l.b16 %v464
  %v634 = vunpack.c.l.b16 %v465
  %v635 = vunpack.c.l.b16 %v466
  %v636 = vpack.c.b16 %v633, %v632
  %v637 = vpack.c.b16 %v635, %v634
  %v656 = vunpack.c.l.b16 %v467
  %v657 = vunpack.c.l.b16 %v468
  %v658 = vunpack.c.l.b16 %v469
  %v659 = vunpack.c.l.b16 %v470
  %v660 = vunpack.c.l.b16 %v471
  %v661 = vunpack.c.l.b16 %v472
  %v662 = vunpack.c.l.b16 %v473
  %v663 = vunpack.c.l.b16 %v474
  %v664 = vunpack.c.l.b16 %v475
  %v665 = vunpack.c.l.b16 %v476
  %v666 = vunpack.c.l.b16 %v477
  %v667 = vunpack.c.l.b16 %v478
  %v668 = vunpack.c.l.b16 %v479
  %v669 = vunpack.c.l.b16 %v480
  %v670 = vunpack.c.l.b16 %v481
  %v671 = vunpack.c.l.b16 %v482
  %v672 = vpack.c.b16 %v657, %v656
  %v673 = vpack.c.b16 %v659, %v658
  %v674 = vpack.c.b16 %v661, %v660
  %v675 = vpack.c.b16 %v663, %v662
  %v676 = vpack.c.b16 %v665, %v664
  %v677 = vpack.c.b16 %v667, %v666
  %v678 = vpack.c.b16 %v669, %v668
  %v679 = vpack.c.b16 %v671, %v670
  %688 = vmatpush.bf16.msra.mxu0 %v679
  %689 = vmatpush.bf16.msra.mxu0 %v678
  %690 = vmatpush.bf16.msra.mxu0 %v677
  %691 = vmatpush.bf16.msra.mxu0 %v676
  %692 = vmatpush.bf16.msra.mxu0 %v675
  %693 = vmatpush.bf16.msra.mxu0 %v674
  %694 = vmatpush.bf16.msra.mxu0 %v673
  %695 = vmatpush.bf16.msra.mxu0 %v672
  %696 = vmatmul.bf16.gmra.mxu0 %v636
  %v697 = vpop.f32.mrf.mxu0
  %v698 = vadd.f32 %v619, %v697
  %v699 = vpop.f32.mrf.mxu0
  %v700 = vadd.f32 %v621, %v699
  %701 = vmatmul.bf16.gmra.mxu0 %v637
  %v702 = vpop.f32.mrf.mxu0
  %v703 = vadd.f32 %v624, %v702
  %v704 = vpop.f32.mrf.mxu0
  %v705 = vadd.f32 %v626, %v704
  %706 = vdwg.mxu0
  %v707 = vld [vmem:[#allocation2] sm:$0xe]
  %v708 = vld [vmem:[#allocation2 + $0xc] sm:$0xe]
  %vm713 = vcmask 1042432
  %vm714 = vcmask 1046532
  %vm715 = vmor %vm713, %vm714
  %v716 = vrot.slane %v707, 5
  %v717 = vrot.slane %v716, 4
  %v718 = vrot.slane %v464, 5
  %v719 = vsel %vm715, %v717, %v718
  %v720 = vrot.slane %v718, 4
  %v721 = vrot.slane %v483, 5
  %v722 = vsel %vm715, %v720, %v721
  %v723 = vrot.slane %v708, 5
  %v724 = vrot.slane %v723, 4
  %v725 = vrot.slane %v466, 5
  %v726 = vsel %vm715, %v724, %v725
  %v727 = vrot.slane %v725, 4
  %v728 = vrot.slane %v484, 5
  %v729 = vsel %vm715, %v727, %v728
  %s730 = scalar_lea.vmem %s4, 128
  %v731 = vld [vmem:[%s730] sm:$0xf]
  %v732 = vld [vmem:[%s730 + $0x4] sm:$0xf]
  %v733 = vld [vmem:[%s730 + $0x8] sm:$0xf]
  %v734 = vld [vmem:[%s730 + $0xc] sm:$0xf]
  %v735 = vld [vmem:[%s730 + $0x10] sm:$0xf]
  %v736 = vld [vmem:[%s730 + $0x14] sm:$0xf]
  %v737 = vld [vmem:[%s730 + $0x18] sm:$0xf]
  %v738 = vld [vmem:[%s730 + $0x1c] sm:$0xf]
  %v739 = vld [vmem:[%s730 + $0x20] sm:$0xf]
  %v740 = vld [vmem:[%s730 + $0x24] sm:$0xf]
  %v741 = vld [vmem:[%s730 + $0x28] sm:$0xf]
  %v742 = vld [vmem:[%s730 + $0x2c] sm:$0xf]
  %v743 = vld [vmem:[%s730 + $0x30] sm:$0xf]
  %v744 = vld [vmem:[%s730 + $0x34] sm:$0xf]
  %v745 = vld [vmem:[%s730 + $0x38] sm:$0xf]
  %v746 = vld [vmem:[%s730 + $0x3c] sm:$0xf]
  %v747 = vunpack.c.l.b16 %v719
  %v748 = vunpack.c.l.b16 %v722
  %v749 = vunpack.c.l.b16 %v726
  %v750 = vunpack.c.l.b16 %v729
  %v751 = vpack.c.b16 %v748, %v747
  %v752 = vpack.c.b16 %v750, %v749
  %v771 = vunpack.c.l.b16 %v731
  %v772 = vunpack.c.l.b16 %v732
  %v773 = vunpack.c.l.b16 %v733
  %v774 = vunpack.c.l.b16 %v734
  %v775 = vunpack.c.l.b16 %v735
  %v776 = vunpack.c.l.b16 %v736
  %v777 = vunpack.c.l.b16 %v737
  %v778 = vunpack.c.l.b16 %v738
  %v779 = vunpack.c.l.b16 %v739
  %v780 = vunpack.c.l.b16 %v740
  %v781 = vunpack.c.l.b16 %v741
  %v782 = vunpack.c.l.b16 %v742
  %v783 = vunpack.c.l.b16 %v743
  %v784 = vunpack.c.l.b16 %v744
  %v785 = vunpack.c.l.b16 %v745
  %v786 = vunpack.c.l.b16 %v746
  %v787 = vpack.c.b16 %v772, %v771
  %v788 = vpack.c.b16 %v774, %v773
  %v789 = vpack.c.b16 %v776, %v775
  %v790 = vpack.c.b16 %v778, %v777
  %v791 = vpack.c.b16 %v780, %v779
  %v792 = vpack.c.b16 %v782, %v781
  %v793 = vpack.c.b16 %v784, %v783
  %v794 = vpack.c.b16 %v786, %v785
  %803 = vmatpush.bf16.msra.mxu0 %v794
  %804 = vmatpush.bf16.msra.mxu0 %v793
  %805 = vmatpush.bf16.msra.mxu0 %v792
  %806 = vmatpush.bf16.msra.mxu0 %v791
  %807 = vmatpush.bf16.msra.mxu0 %v790
  %808 = vmatpush.bf16.msra.mxu0 %v789
  %809 = vmatpush.bf16.msra.mxu0 %v788
  %810 = vmatpush.bf16.msra.mxu0 %v787
  %811 = vmatmul.bf16.gmra.mxu0 %v751
  %v812 = vpop.f32.mrf.mxu0
  %v813 = vadd.f32 0.0, %v812
  %v814 = vpop.f32.mrf.mxu0
  %v815 = vadd.f32 0.0, %v814
  %816 = vmatmul.bf16.gmra.mxu0 %v752
  %v817 = vpop.f32.mrf.mxu0
  %v818 = vadd.f32 0.0, %v817
  %v819 = vpop.f32.mrf.mxu0
  %v820 = vadd.f32 0.0, %v819
  %821 = vdwg.mxu0
  %v822 = vadd.f32 %v698, %v813
  %v823 = vadd.f32 %v700, %v815
  %v824 = vadd.f32 %v703, %v818
  %v825 = vadd.f32 %v705, %v820
  %v826 = vadd.f32 %v822, %v823
  %v827 = vadd.f32 %v826, %v824
  %v828 = vadd.f32 %v827, %v825
  %v829 = vrot.slane %v828, 4
  %v830 = vadd.f32 %v828, %v829
  %v831 = vrot.slane %v830, 2
  %v832 = vadd.f32 %v830, %v831
  %v833 = vrot.slane %v832, 1
  %v834 = vadd.f32 %v832, %v833
  %v835 = vmul.f32 %v822, %v822
  %v836 = vmul.f32 %v823, %v823
  %v837 = vmul.f32 %v824, %v824
  %v838 = vmul.f32 %v825, %v825
  %v839 = vadd.f32 %v835, %v836
  %v840 = vadd.f32 %v839, %v837
  %v841 = vadd.f32 %v840, %v838
  %v842 = vrot.slane %v841, 4
  %v843 = vadd.f32 %v841, %v842
  %v844 = vrot.slane %v843, 2
  %v845 = vadd.f32 %v843, %v844
  %v846 = vrot.slane %v845, 1
  %v847 = vadd.f32 %v845, %v846
  %848 = vrot.lane.b32.xlu0 %v834, 8
  %v849 = vpop.permute.xlu0 %848
  %v850 = vadd.f32 %v834, %v849
  %851 = vrot.lane.b32.xlu0 %v847, 8
  %v852 = vpop.permute.xlu0 %851
  %v853 = vadd.f32 %v847, %v852
  %854 = vrot.lane.b32.xlu0 %v850, 16
  %v855 = vpop.permute.xlu0 %854
  %v856 = vadd.f32 %v850, %v855
  %857 = vrot.lane.b32.xlu0 %v853, 16
  %v858 = vpop.permute.xlu0 %857
  %v859 = vadd.f32 %v853, %v858
  %860 = vrot.lane.b32.xlu0 %v856, 32
  %v861 = vpop.permute.xlu0 %860
  %v862 = vadd.f32 %v856, %v861
  %863 = vrot.lane.b32.xlu0 %v859, 32
  %v864 = vpop.permute.xlu0 %863
  %v865 = vadd.f32 %v859, %v864
  %866 = vrot.lane.b32.xlu0 %v862, 64
  %v867 = vpop.permute.xlu0 %866
  %v868 = vadd.f32 %v862, %v867
  %869 = vrot.lane.b32.xlu0 %v865, 64
  %v870 = vpop.permute.xlu0 %869
  %v871 = vadd.f32 %v865, %v870
  %v872 = vmul.f32 %v868, 0.001953125
  %v873 = vmul.f32 %v871, 0.001953125
  %v874 = vmul.f32 %v872, %v872
  %v875 = vsub.f32 %v873, %v874
  %v876 = vld [vmem:[%s5] sm:$0x1]
  %v877 = vadd.f32 %v875, 1e-05
  %v878 = vrsqrt.pop %v877
  %v879 = vmul.f32 %v878, %v877
  %v880 = vmul.f32 %v879, %v878
  %v881 = vmul.f32 0.5, %v880
  %v882 = vsub.f32 1.5, %v881
  %v883 = vmul.f32 %v878, %v882
  %vm884 = vweird.f32 %v877
  %vm885 = vweird.f32 %v878
  %vm886 = vmor %vm884, %vm885
  %v887 = vsel %vm886, %v878, %v883
  %v888 = vmul.f32 %v876, %v887
  %v889 = vld [vmem:[%s6] sm:$0x1]
  %v890 = vmul.f32 %v872, %v888
  %v891 = vsub.f32 %v889, %v890
  %v893 = vperm.slane %v888, 0
  %v895 = vmul.f32 %v822, %v893
  %v896 = vmul.f32 %v823, %v893
  %v897 = vmul.f32 %v824, %v893
  %v898 = vmul.f32 %v825, %v893
  %v900 = vperm.slane %v891, 0
  %v902 = vadd.f32 %v895, %v900
  %v903 = vadd.f32 %v896, %v900
  %v904 = vadd.f32 %v897, %v900
  %v905 = vadd.f32 %v898, %v900
  %v906 = vld [vmem:[%s0 + $0x1] sm:$0xff]
  %v907 = vld [vmem:[%s0 + $0x9] sm:$0xff]
  %v908 = vld [vmem:[%s0 + $0x19] sm:$0xff]
  %v909 = vld [vmem:[%s0 + $0x21] sm:$0xff]
  %v910 = vadd.f32 %v902, %v906
  %v911 = vadd.f32 %v903, %v907
  %v912 = vadd.f32 %v904, %v908
  %v913 = vadd.f32 %v905, %v909
  %v914 = vmax.f32 %v910, 0.0
  %v915 = vmax.f32 %v911, 0.0
  %v916 = vmax.f32 %v912, 0.0
  %v917 = vmax.f32 %v913, 0.0
  %918 = vst [vmem:[%s7] sm:$0xff] %v914
  %919 = vst [vmem:[%s7 + $0x8] sm:$0xff] %v915
  %920 = vst [vmem:[%s7 + $0x10] sm:$0xff] %v916
  %921 = vst [vmem:[%s7 + $0x18] sm:$0xff] %v917
  // Predicated region
  $region30: #{basic_block_forward.1} parent=0 // pred_check
    _
  $region31: #{basic_block_forward.1} parent=0 // pred_check_branch
    %923 = sbr.rel (0) target = $region33
  $region32: #{basic_block_forward.1} parent=0 // pred_region
    _
  $region33: #{basic_block_forward.1} parent=0 // pred_fallthru
    _
  // Predicated region
  $region34: #{basic_block_forward.1} parent=0 // pred_check
    _
  $region35: #{basic_block_forward.1} parent=0 // pred_check_branch
    %925 = sbr.rel (0) target = $region37
  $region36: #{basic_block_forward.1} parent=0 // pred_region
    _
  $region37: #{basic_block_forward.1} parent=0 // pred_fallthru
    _

</llo_original>
